<compile_context>
chip_gen: v5e
topology: v5e:2x2
jax: 0.10.0
libtpu: 0.0.40
codegen_flags: <defaults>
</compile_context>

<pallas_src>
import functools

import jax
import jax.numpy as jnp
from jax.experimental import pallas as pl
from jax.experimental.pallas import tpu as pltpu

LANE = 128  # TPU lane width


def generator_kernel(p_ref, x_ref, o_ref):
    # p_ref: (8, 128) packed parameter slab, resident across the whole grid:
    #   p[0:3, 0]   = w1   (layer-1 weights, fan_in = 1)
    #   p[0:3, 1]   = b1
    #   p[0:4, 2]   = b2
    #   p[0:4, 3:6] = w2^T (shape [out=4, in=3])
    # x_ref: (1, TB)   batch tile on lanes
    # o_ref: (4, TB)   output features on sublanes, batch on lanes
    p = p_ref[...]                       # one vreg load of the whole slab
    x = x_ref[...]                       # [1, TB]

    w1 = p[0:3, 0:1]                     # [3, 1]
    b1 = p[0:3, 1:2]                     # [3, 1]
    b2 = p[0:4, 2:3]                     # [4, 1]

    # Layer 1: outer-product FMA on the VPU (no MXU), sigmoid on the EUP.
    h = jax.nn.sigmoid(w1 * x + b1)      # [3, TB]

    # Layer 2: K=3 contraction unrolled as three broadcast FMAs.
    y = (p[0:4, 3:4] * h[0:1, :]
         + p[0:4, 4:5] * h[1:2, :]
         + p[0:4, 5:6] * h[2:3, :]
         + b2)                           # [4, TB]
    o_ref[...] = jax.nn.sigmoid(y)


def pack_params(w1, b1, w2, b2):
    """Pack all Generator params into a single (8, 128) f32 slab (one DMA)."""
    slab = jnp.zeros((8, LANE), jnp.float32)
    slab = slab.at[0:3, 0].set(w1[0, :].astype(jnp.float32))   # w1: [1, 3]
    slab = slab.at[0:3, 1].set(b1.astype(jnp.float32))         # b1: [3]
    slab = slab.at[0:4, 2].set(b2.astype(jnp.float32))         # b2: [4]
    slab = slab.at[0:4, 3:6].set(w2.T.astype(jnp.float32))     # w2: [3, 4] -> [4, 3]
    return slab


@functools.partial(jax.jit, static_argnames=("tb",))
def generator_forward(x, w1, b1, w2, b2, *, tb=1024):
    """x: [B, 1] -> [B, 4], matching Linear(1,3)+Sigmoid -> Linear(3,4)+Sigmoid."""
    B = x.shape[0]
    out_dim = 4

    # Batch tile on the lane axis: a multiple of 128, capped at `tb`.
    TB = min(tb, pl.cdiv(B, LANE) * LANE)
    B_pad = pl.cdiv(B, TB) * TB
    num_blocks = B_pad // TB

    # Lane-dense layout: pad batch to B_pad and carry it as the last (lane) dim.
    x_t = jnp.zeros((1, B_pad), jnp.float32).at[0, :B].set(x[:, 0].astype(jnp.float32))
    p_slab = pack_params(w1, b1, w2, b2)

    out_t = pl.pallas_call(
        generator_kernel,
        out_shape=jax.ShapeDtypeStruct((out_dim, B_pad), jnp.float32),
        grid_spec=pltpu.PrefetchScalarGridSpec(
            num_scalar_prefetch=0,
            grid=(num_blocks,),
            in_specs=[
                pl.BlockSpec((8, LANE), lambda i: (0, 0)),        # params slab (resident)
                pl.BlockSpec((1, TB), lambda i: (0, i)),          # x batch tile
            ],
            out_specs=pl.BlockSpec((out_dim, TB), lambda i: (0, i)),
        ),
        compiler_params=pltpu.CompilerParams(
            dimension_semantics=("parallel",),   # shards batch tiles across TCs on v7x
        ),
    )(p_slab, x_t)

    return out_t[:, :B].T                                         # [B, 4]


def init_params(key):
    # Deterministic init mimicking nn.Linear's uniform(-1/sqrt(fan_in), 1/sqrt(fan_in)).
    k1, k2, k3, k4 = jax.random.split(key, 4)
    bound1 = 1.0                      # fan_in = 1
    bound2 = 1.0 / jnp.sqrt(3.0)      # fan_in = 3
    w1 = jax.random.uniform(k1, (1, 3), jnp.float32, -bound1, bound1)   # [in, out]
    b1 = jax.random.uniform(k2, (3,), jnp.float32, -bound1, bound1)
    w2 = jax.random.uniform(k3, (3, 4), jnp.float32, -bound2, bound2)
    b2 = jax.random.uniform(k4, (4,), jnp.float32, -bound2, bound2)
    return w1, b1, w2, b2


def reference_forward(x, w1, b1, w2, b2):
    h = jax.nn.sigmoid(x @ w1 + b1)
    return jax.nn.sigmoid(h @ w2 + b2)


if __name__ == "__main__":
    key = jax.random.PRNGKey(0)
    pkey, xkey = jax.random.split(key)
    w1, b1, w2, b2 = init_params(pkey)

    batch = 8
    x = jax.random.uniform(xkey, (batch, 1), jnp.float32)   # Generator input: [B, 1]

    out = generator_forward(x, w1, b1, w2, b2)
    out = jax.block_until_ready(out)

    ref = reference_forward(x, w1, b1, w2, b2)
    assert out.shape == (batch, 4)
    assert jnp.allclose(out, ref, atol=1e-5, rtol=1e-5)

    print("KERNEL_OK")
</pallas_src>

<mosaic_0001>
module attributes {stable_mosaic.version = 11 : i64} {
  func.func @generator_kernel(%arg0: i32, %arg1: memref<8x128xf32, #tpu.memory_space<vmem>>, %arg2: memref<1x128xf32, #tpu.memory_space<vmem>>, %arg3: memref<4x128xf32, #tpu.memory_space<vmem>>) attributes {dimension_semantics = [#tpu.dimension_semantics<parallel>], iteration_bounds = array<i64: 1>, scalar_prefetch = 0 : i64, scratch_operands = 0 : i64, tpu.core_type = #tpu.core_type<tc>, window_params = [{pipeline_mode = #tpu.pipeline_mode<synchronous>, transform_indices = @transform_0, window_bounds = array<i64: 8, 128>}, {transform_indices = @transform_1, window_bounds = array<i64: 1, 128>}, {transform_indices = @transform_2, window_bounds = array<i64: 4, 128>}]} {
    %c0 = arith.constant 0 : index
    %c0_0 = arith.constant 0 : index
    %0 = vector.load %arg1[%c0, %c0_0] : memref<8x128xf32, #tpu.memory_space<vmem>>, vector<8x128xf32>
    %c0_1 = arith.constant 0 : index
    %c0_2 = arith.constant 0 : index
    %1 = vector.load %arg2[%c0_1, %c0_2] : memref<1x128xf32, #tpu.memory_space<vmem>>, vector<1x128xf32>
    %2 = vector.extract_strided_slice %0 {offsets = [0, 0], sizes = [3, 1], strides = [1, 1]} : vector<8x128xf32> to vector<3x1xf32>
    %3 = vector.extract_strided_slice %0 {offsets = [0, 1], sizes = [3, 1], strides = [1, 1]} : vector<8x128xf32> to vector<3x1xf32>
    %4 = vector.extract_strided_slice %0 {offsets = [0, 2], sizes = [4, 1], strides = [1, 1]} : vector<8x128xf32> to vector<4x1xf32>
    %5 = vector.broadcast %2 : vector<3x1xf32> to vector<3x128xf32>
    %6 = vector.broadcast %1 : vector<1x128xf32> to vector<3x128xf32>
    %7 = arith.mulf %5, %6 : vector<3x128xf32>
    %8 = vector.broadcast %3 : vector<3x1xf32> to vector<3x128xf32>
    %9 = arith.addf %7, %8 : vector<3x128xf32>
    %10 = arith.negf %9 : vector<3x128xf32>
    %11 = math.exp %10 : vector<3x128xf32>
    %cst = arith.constant 1.000000e+00 : f32
    %12 = vector.broadcast %cst : f32 to vector<3x128xf32>
    %13 = arith.addf %12, %11 : vector<3x128xf32>
    %14 = arith.divf %12, %13 : vector<3x128xf32>
    %15 = vector.extract_strided_slice %0 {offsets = [0, 3], sizes = [4, 1], strides = [1, 1]} : vector<8x128xf32> to vector<4x1xf32>
    %16 = vector.extract_strided_slice %14 {offsets = [0, 0], sizes = [1, 128], strides = [1, 1]} : vector<3x128xf32> to vector<1x128xf32>
    %17 = vector.broadcast %15 : vector<4x1xf32> to vector<4x128xf32>
    %18 = vector.broadcast %16 : vector<1x128xf32> to vector<4x128xf32>
    %19 = arith.mulf %17, %18 : vector<4x128xf32>
    %20 = vector.extract_strided_slice %0 {offsets = [0, 4], sizes = [4, 1], strides = [1, 1]} : vector<8x128xf32> to vector<4x1xf32>
    %21 = vector.extract_strided_slice %14 {offsets = [1, 0], sizes = [1, 128], strides = [1, 1]} : vector<3x128xf32> to vector<1x128xf32>
    %22 = vector.broadcast %20 : vector<4x1xf32> to vector<4x128xf32>
    %23 = vector.broadcast %21 : vector<1x128xf32> to vector<4x128xf32>
    %24 = arith.mulf %22, %23 : vector<4x128xf32>
    %25 = arith.addf %19, %24 : vector<4x128xf32>
    %26 = vector.extract_strided_slice %0 {offsets = [0, 5], sizes = [4, 1], strides = [1, 1]} : vector<8x128xf32> to vector<4x1xf32>
    %27 = vector.extract_strided_slice %14 {offsets = [2, 0], sizes = [1, 128], strides = [1, 1]} : vector<3x128xf32> to vector<1x128xf32>
    %28 = vector.broadcast %26 : vector<4x1xf32> to vector<4x128xf32>
    %29 = vector.broadcast %27 : vector<1x128xf32> to vector<4x128xf32>
    %30 = arith.mulf %28, %29 : vector<4x128xf32>
    %31 = arith.addf %25, %30 : vector<4x128xf32>
    %32 = vector.broadcast %4 : vector<4x1xf32> to vector<4x128xf32>
    %33 = arith.addf %31, %32 : vector<4x128xf32>
    %34 = arith.negf %33 : vector<4x128xf32>
    %35 = math.exp %34 : vector<4x128xf32>
    %cst_3 = arith.constant 1.000000e+00 : f32
    %36 = vector.broadcast %cst_3 : f32 to vector<4x128xf32>
    %37 = arith.addf %36, %35 : vector<4x128xf32>
    %38 = arith.divf %36, %37 : vector<4x128xf32>
    %c0_4 = arith.constant 0 : index
    %c0_5 = arith.constant 0 : index
    %39 = vector.load %arg3[%c0_4, %c0_5] : memref<4x128xf32, #tpu.memory_space<vmem>>, vector<4x128xf32>
    tpu.vector_store %arg3[%c0_4, %c0_5], %38 {strides = array<i32>} : memref<4x128xf32, #tpu.memory_space<vmem>>, vector<4x128xf32>,
    return
  }
  func.func @transform_0(%arg0: i32) -> (i32, i32) {
    %c0_i32 = arith.constant 0 : i32
    %c0_i32_0 = arith.constant 0 : i32
    %c0_i32_1 = arith.constant 0 : i32
    return %c0_i32, %c0_i32_0 : i32, i32
  }
  func.func @transform_1(%arg0: i32) -> (i32, i32) {
    %c0_i32 = arith.constant 0 : i32
    %c0_i32_0 = arith.constant 0 : i32
    return %c0_i32, %arg0 : i32, i32
  }
  func.func @transform_2(%arg0: i32) -> (i32, i32) {
    %c0_i32 = arith.constant 0 : i32
    %c0_i32_0 = arith.constant 0 : i32
    return %c0_i32, %arg0 : i32, i32
  }
}

</mosaic_0001>

<llo_original>
// kernel: generator_forward.1
$region0: #{generator_forward.1}
  #allocation0 [shape = 'u32[]', space=smem, size = 0x4, offset = 0x4, fixed_abs, tag = 'smem constant byte address 0x4 - core index']
  #allocation1 [shape = 'u32[72,128]{1,0:T(1,128)}', space=vmem, size = 0x9000, scoped, tag = 'internal scratch']
  %s0 = inlined_call_operand.vmem [shape: f32[8,128], index: 0, kind: input, shape index: {}]
  %s1 = inlined_call_operand.vmem [shape: f32[1,128], index: 1, kind: input, shape index: {}]
  %s2 = inlined_call_operand.vmem [shape: f32[4,128], index: 2, kind: output, shape index: {}]
  %s3 = sld [smem:[#allocation0]]
  $region18: #{generator_forward.1} parent=0
    _
  %s5 = ssub.s32 1, %s3
  %s6 = scalar_select 0, %s5, %s3
  // Predicated region
  $region2: #{generator_forward.1} parent=0 // pred_check
    _
  $region3: #{generator_forward.1} parent=0 // pred_check_branch
    %8 = sbr.rel (0) target = $region5
  $region4: #{generator_forward.1} parent=0 // pred_region
    _
  $region5: #{generator_forward.1} parent=0 // pred_fallthru
    _
  // Predicated region
  $region6: #{generator_forward.1} parent=0 // pred_check
    _
  $region7: #{generator_forward.1} parent=0 // pred_check_branch
    %10 = sbr.rel (0) target = $region9
  $region8: #{generator_forward.1} parent=0 // pred_region
    _
  $region9: #{generator_forward.1} parent=0 // pred_fallthru
    _
  %v11 = vld [vmem:[%s0] sm:$0xff]
  %v12 = vld [vmem:[%s1] sm:$0x1]
  %14 = vset.pattern.permute.xlu0 0
  %15 = vperm.xlu0 %14, %v11
  %v16 = vpop.permute.xlu0 %15
  %v19 = vperm.slane %v12, 0
  %v21 = vmul.f32 %v16, %v19
  %22 = vset.pattern.permute.xlu0 1
  %23 = vperm.xlu0 %22, %v11
  %v24 = vpop.permute.xlu0 %23
  %v26 = vadd.f32 %v21, %v24
  %v27 = vxor.u32 %v26, 2147483648
  %v28 = vmul.f32 %v27, 1.442695
  %v29 = vpow.pop %v28
  %v30 = vadd.f32 %v29, 1.0
  %v31 = vrcp.pop %v30
  %v32 = vmul.f32 %v30, %v31
  %v33 = vsub.f32 1.0, %v32
  %v34 = vmul.f32 %v31, %v33
  %v35 = vadd.f32 %v31, %v34
  %vm36 = vweird.f32 %v30
  %vm37 = vweird.f32 %v31
  %vm38 = vmor %vm36, %vm37
  %v39 = vsel %vm38, %v31, %v35
  %v40 = vand.u32 2147483647, %v30
  %vm41 = vcmp.eq.f32.partialorder %v40, 8.507059e+37
  %v42 = vand.u32 %v30, 2147483648
  %v43 = vor.u32 1.1754944e-38, %v42
  %v44 = vsel %vm41, %v43, %v39
  %v45 = vmul.f32 1.0, %v44
  %46 = vset.pattern.permute.xlu0 3
  %47 = vperm.xlu0 %46, %v11
  %v48 = vpop.permute.xlu0 %47
  %v50 = vperm.slane %v45, 0
  %v51 = vmul.f32 %v48, %v50
  %52 = vset.pattern.permute.xlu0 4
  %53 = vperm.xlu0 %52, %v11
  %v54 = vpop.permute.xlu0 %53
  %v56 = vperm.slane %v45, 1
  %v57 = vmul.f32 %v54, %v56
  %v58 = vadd.f32 %v51, %v57
  %59 = vset.pattern.permute.xlu0 5
  %60 = vperm.xlu0 %59, %v11
  %v61 = vpop.permute.xlu0 %60
  %v63 = vperm.slane %v45, 2
  %v64 = vmul.f32 %v61, %v63
  %v65 = vadd.f32 %v58, %v64
  %66 = vset.pattern.permute.xlu0 2
  %67 = vperm.xlu0 %66, %v11
  %v68 = vpop.permute.xlu0 %67
  %v70 = vadd.f32 %v65, %v68
  %v71 = vxor.u32 %v70, 2147483648
  %v72 = vmul.f32 %v71, 1.442695
  %v73 = vpow.pop %v72
  %v74 = vadd.f32 %v73, 1.0
  %v75 = vrcp.pop %v74
  %v76 = vmul.f32 %v74, %v75
  %v77 = vsub.f32 1.0, %v76
  %v78 = vmul.f32 %v75, %v77
  %v79 = vadd.f32 %v75, %v78
  %vm80 = vweird.f32 %v74
  %vm81 = vweird.f32 %v75
  %vm82 = vmor %vm80, %vm81
  %v83 = vsel %vm82, %v75, %v79
  %v84 = vand.u32 2147483647, %v74
  %vm85 = vcmp.eq.f32.partialorder %v84, 8.507059e+37
  %v86 = vand.u32 %v74, 2147483648
  %v87 = vor.u32 1.1754944e-38, %v86
  %v88 = vsel %vm85, %v87, %v83
  %v89 = vmul.f32 1.0, %v88
  %90 = vst [vmem:[%s2] sm:$0xf] %v89
  // Predicated region
  $region10: #{generator_forward.1} parent=0 // pred_check
    _
  $region11: #{generator_forward.1} parent=0 // pred_check_branch
    %92 = sbr.rel (0) target = $region13
  $region12: #{generator_forward.1} parent=0 // pred_region
    _
  $region13: #{generator_forward.1} parent=0 // pred_fallthru
    _
  // Predicated region
  $region14: #{generator_forward.1} parent=0 // pred_check
    _
  $region15: #{generator_forward.1} parent=0 // pred_check_branch
    %94 = sbr.rel (0) target = $region17
  $region16: #{generator_forward.1} parent=0 // pred_region
    _
  $region17: #{generator_forward.1} parent=0 // pred_fallthru
    _

</llo_original>
